<compile_context>
chip_gen: v5e
topology: v5e:2x2
jax: 0.10.0
libtpu: 0.0.40
codegen_flags: <defaults>
</compile_context>

<pallas_src>
import jax
import jax.numpy as jnp
from jax.experimental import pallas as pl
from jax.experimental.pallas import tpu as pltpu

KERNEL_SIZE = 4
STRIDE = 4


def _round_up(a: int, b: int) -> int:
    return (a + b - 1) // b * b


def _proj_kernel(w_ref, p_ref, o_ref):
    # w_ref: (E, K)   projection weight (resident across the grid)
    # p_ref: (K, TL)  transposed patches for one (batch, L-tile)
    # o_ref: (E, TL)  output tile, written directly in NCL layout
    o_ref[...] = jnp.dot(
        w_ref[...], p_ref[...], preferred_element_type=jnp.float32
    ).astype(o_ref.dtype)


def patch_embed(x, weight, *, tl: int = 512):
    """Forward pass of PatchEmbed.

    x:      (B, C_in, L)     -- PyTorch NCL layout
    weight: (E, C_in, 4)     -- nn.Conv1d weight, bias=False
    returns (B, E, L // 4)   -- PyTorch NCL layout
    """
    B, C, L = x.shape
    E = weight.shape[0]
    assert L % STRIDE == 0, "length must be divisible by stride=4"
    L_out = L // STRIDE
    K = C * KERNEL_SIZE

    # Lane-dense tiling of the output's last dim (L_out), padded to 128 multiple.
    TL = min(tl, _round_up(L_out, 128))
    L_pad = _round_up(L_out, TL)

    # Glue (input-sized, cheap): patches^T  (B, K, L_out), lane-dense along L_out.
    # patches_t[b, c*4 + k, t] = x[b, c, 4*t + k]
    patches_t = (
        x.reshape(B, C, L_out, KERNEL_SIZE)   # (B, C, T, k)
        .transpose(0, 1, 3, 2)                # (B, C, k, T)
        .reshape(B, K, L_out)                 # (B, K, T)
    )
    if L_pad != L_out:
        patches_t = jnp.pad(patches_t, ((0, 0), (0, 0), (0, L_pad - L_out)))

    # Weight (E, C, k) -> (E, K); dotting over K matches the c*4+k flattening.
    w_mat = weight.reshape(E, K)

    grid = (B, L_pad // TL)
    out = pl.pallas_call(
        _proj_kernel,
        out_shape=jax.ShapeDtypeStruct((B, E, L_pad), x.dtype),
        grid=grid,
        in_specs=[
            # Weight: constant index_map -> DMA'd once, stays VMEM-resident.
            pl.BlockSpec((E, K), lambda b, j: (0, 0)),
            # Patches^T: one (K, TL) tile per grid point, batch dim squeezed.
            pl.BlockSpec((pl.Squeezed(), K, TL), lambda b, j: (b, 0, j)),
        ],
        out_specs=pl.BlockSpec((pl.Squeezed(), E, TL), lambda b, j: (b, 0, j)),
        compiler_params=pltpu.CompilerParams(
            dimension_semantics=("parallel", "parallel"),
        ),
    )(w_mat, patches_t)

    if L_pad != L_out:
        out = out[:, :, :L_out]
    return out


if __name__ == "__main__":
    key = jax.random.PRNGKey(0)
    k_x, k_w = jax.random.split(key)

    B, C_in, L = 2, 4, 16
    E = 32  # embed_dim

    x = jax.random.normal(k_x, (B, C_in, L), dtype=jnp.float32)
    # deterministic Conv1d weight (E, C_in, kernel_size=4), bias=False
    bound = 1.0 / (C_in * KERNEL_SIZE) ** 0.5
    w = jax.random.uniform(
        k_w, (E, C_in, KERNEL_SIZE), dtype=jnp.float32, minval=-bound, maxval=bound
    )

    y = patch_embed(x, w)
    y = jax.block_until_ready(y)

    # reference check (plain JAX einsum over the same patch decomposition)
    patches_ref = x.reshape(B, C_in, L // STRIDE, KERNEL_SIZE).transpose(0, 2, 1, 3)
    y_ref = jnp.einsum("btck,eck->bet", patches_ref, w)
    assert y.shape == (B, E, L // STRIDE)
    assert jnp.allclose(y, y_ref, atol=1e-5, rtol=1e-5)

    print("KERNEL_OK")
</pallas_src>

<mosaic_0001>
module attributes {stable_mosaic.version = 11 : i64} {
  func.func @_proj_kernel(%arg0: i32, %arg1: i32, %arg2: memref<32x16xf32, #tpu.memory_space<vmem>>, %arg3: memref<1x16x128xf32, #tpu.memory_space<vmem>>, %arg4: memref<1x32x128xf32, #tpu.memory_space<vmem>>) attributes {dimension_semantics = [#tpu.dimension_semantics<parallel>, #tpu.dimension_semantics<parallel>], iteration_bounds = array<i64: 2, 1>, scalar_prefetch = 0 : i64, scratch_operands = 0 : i64, tpu.core_type = #tpu.core_type<tc>, window_params = [{pipeline_mode = #tpu.pipeline_mode<synchronous>, transform_indices = @transform_0, window_bounds = array<i64: 32, 16>}, {transform_indices = @transform_1, window_bounds = array<i64: 1, 16, 128>}, {transform_indices = @transform_2, window_bounds = array<i64: 1, 32, 128>}]} {
    %c0 = arith.constant 0 : index
    %c0_0 = arith.constant 0 : index
    %0 = vector.load %arg2[%c0, %c0_0] : memref<32x16xf32, #tpu.memory_space<vmem>>, vector<32x16xf32>
    %c0_1 = arith.constant 0 : index
    %c0_2 = arith.constant 0 : index
    %c0_3 = arith.constant 0 : index
    %1 = vector.load %arg3[%c0_1, %c0_2, %c0_3] : memref<1x16x128xf32, #tpu.memory_space<vmem>>, vector<1x16x128xf32>
    %2 = vector.shape_cast %1 : vector<1x16x128xf32> to vector<16x128xf32>
    %cst = arith.constant dense<0.000000e+00> : vector<32x128xf32>
    %3 = tpu.matmul %0, %2, %cst {dimension_numbers = #tpu.dot_dimension_numbers<[1], [0], [0], [1], [0, 0, 1, 1], [], []>} : vector<32x16xf32>, vector<16x128xf32>, vector<32x128xf32> -> vector<32x128xf32>
    %c0_4 = arith.constant 0 : index
    %c0_5 = arith.constant 0 : index
    %c0_6 = arith.constant 0 : index
    %4 = vector.load %arg4[%c0_4, %c0_5, %c0_6] : memref<1x32x128xf32, #tpu.memory_space<vmem>>, vector<1x32x128xf32>
    %5 = vector.shape_cast %4 : vector<1x32x128xf32> to vector<32x128xf32>
    %6 = vector.shape_cast %3 : vector<32x128xf32> to vector<1x32x128xf32>
    tpu.vector_store %arg4[%c0_4, %c0_5, %c0_6], %6 {strides = array<i32>} : memref<1x32x128xf32, #tpu.memory_space<vmem>>, vector<1x32x128xf32>,
    return
  }
  func.func @transform_0(%arg0: i32, %arg1: i32) -> (i32, i32) {
    %c0_i32 = arith.constant 0 : i32
    %c0_i32_0 = arith.constant 0 : i32
    %c0_i32_1 = arith.constant 0 : i32
    return %c0_i32, %c0_i32_0 : i32, i32
  }
  func.func @transform_1(%arg0: i32, %arg1: i32) -> (i32, i32, i32) {
    %c0_i32 = arith.constant 0 : i32
    %c0_i32_0 = arith.constant 0 : i32
    return %arg0, %c0_i32, %arg1 : i32, i32, i32
  }
  func.func @transform_2(%arg0: i32, %arg1: i32) -> (i32, i32, i32) {
    %c0_i32 = arith.constant 0 : i32
    %c0_i32_0 = arith.constant 0 : i32
    return %arg0, %c0_i32, %arg1 : i32, i32, i32
  }
}

</mosaic_0001>

<llo_original>
// kernel: tpu_custom_call.1
$region0: #{tpu_custom_call.1}
  #allocation0 [shape = 'u32[]', space=smem, size = 0x4, offset = 0x4, fixed_abs, tag = 'smem constant byte address 0x4 - core index']
  #allocation1 [shape = 'u32[72,128]{1,0:T(1,128)}', space=vmem, size = 0x9000, scoped, tag = 'internal scratch']
  %s0 = inlined_call_operand.vmem [shape: f32[32,16], index: 0, kind: input, shape index: {}]
  %s1 = inlined_call_operand.vmem [shape: f32[2,16,128], index: 1, kind: input, shape index: {}]
  %s2 = inlined_call_operand.hbm [shape: f32[2,32,128], index: 2, kind: output, shape index: {}]
  %s3 = sld [smem:[#allocation0]]
  $region41: #{tpu_custom_call.1} parent=0
    _
  %s5 = ssub.s32 1, %s3
  %s6 = scalar_select 0, %s5, %s3
  $region1: #{tpu_custom_call.1} parent=0
    #allocation2 [shape = 'u8[32768]{0}', space=vmem, size = 0x8000, scoped, tag = 'output window, operand 0']
    #allocation3 [shape = 's32[2]{0}', space=sflag, size = 0x8, scoped, tag = 'scoped memory for tpu_custom_call.1']
    %7 = vsyncpa [#allocation3], 0
    %s8 = scalar_lea.sflag [#allocation3], 1
    %9 = vsyncpa %s8, 0
    loop: start=0, step=1, limit=4
    $region2: #{tpu_custom_call.1} parent=1 // loop_pre_header
      _
    $region3: #{tpu_custom_call.1} parent=1 // loop_header
      %s11 = sphi 0, %s15
      %p12 = scmp.ge.s32.totalorder %s11, 4
      %s18 = sphi 0, %s30
      %s19 = sphi 0, %s26
      %s20 = sphi 0, %s18
      %s21 = sphi 0, %s19
      %s22 = sphi 0, %s20
      %s23 = sphi 0, %s21
      %s31 = sphi 0, %s31
      %s33 = sphi 0, %s31
      %s34 = sphi 0, %s33
      %s48 = sphi 0, %s34
      %s56 = sphi 0, %s58
      %s59 = sphi 0, %s56
      %s60 = sphi 0, %s59
      %s76 = sphi 0, %s60
      %s84 = sphi 0, %s86
      %s87 = sphi 0, %s84
      %s88 = sphi 0, %s87
      %s104 = sphi 0, %s88
    $region4: #{tpu_custom_call.1} parent=1 // loop_header_branch
      %14 = sbr.rel (%p12) target = $region8
    $region5: #{tpu_custom_call.1} parent=1 // loop_body
      %s16 = ssub.s32 %s11, 1
      %s17 = ssub.s32 %s11, 2
      %s24 = sadd.s32 1, %s19
      %p25 = scmp.ge.s32.totalorder %s24, 1
      %s26 = scalar_select %p25, 0, %s24
      %s27 = sadd.s32 1, %s18
      %s28 = scalar_select %p25, %s27, %s18
      %p29 = scmp.ge.s32.totalorder %s28, 2
      %s30 = scalar_select %p29, 0, %s28
      %s32 = sadd.s32 %s31, 1
      %p35 = scmp.eq.s32.totalorder %s11, 1
      %p36 = scmp.ne.s32.totalorder %s31, %s33
      %p37 = scmp.eq.s32.totalorder %s11, 0
      %p38 = por %p36, %p37
      %p39 = scmp.ne.s32.totalorder %s31, %s33
      %p40 = scmp.eq.s32.totalorder %s16, 1
      %p41 = por %p39, %p40
      %p42 = scmp.ne.s32.totalorder %s33, %s34
      %p43 = scmp.eq.s32.totalorder %s16, 0
      %p44 = por %p42, %p43
      %p45 = scmp.ne.s32.totalorder %s33, %s34
      %p46 = scmp.eq.s32.totalorder %s17, 1
      %p47 = por %p45, %p46
      %p49 = scmp.ne.s32.totalorder %s34, %s48
      %p50 = scmp.eq.s32.totalorder %s17, 0
      %p51 = por %p49, %p50
      %s52 = ssub.s32 %s18, %s30
      %s53 = ssub.s32 %s19, %s26
      %s54 = sor.u32 %s52, %s53
      %p55 = scmp.eq.s32.totalorder %s54, 0
      %s57 = sadd.s32 %s56, 1
      %s58 = scalar_select %p55, %s56, %s57
      %p61 = pneg %p55
      %p62 = scmp.eq.s32.totalorder %s11, 1
      %p63 = por %p61, %p62
      %p64 = scmp.ne.s32.totalorder %s56, %s59
      %p65 = scmp.eq.s32.totalorder %s11, 0
      %p66 = por %p64, %p65
      %p67 = scmp.ne.s32.totalorder %s56, %s59
      %p68 = scmp.eq.s32.totalorder %s16, 1
      %p69 = por %p67, %p68
      %p70 = scmp.ne.s32.totalorder %s59, %s60
      %p71 = scmp.eq.s32.totalorder %s16, 0
      %p72 = por %p70, %p71
      %p73 = scmp.ne.s32.totalorder %s59, %s60
      %p74 = scmp.eq.s32.totalorder %s17, 1
      %p75 = por %p73, %p74
      %p77 = scmp.ne.s32.totalorder %s60, %s76
      %p78 = scmp.eq.s32.totalorder %s17, 0
      %p79 = por %p77, %p78
      %s80 = ssub.s32 %s18, %s30
      %s81 = ssub.s32 %s19, %s26
      %s82 = sor.u32 %s80, %s81
      %p83 = scmp.eq.s32.totalorder %s82, 0
      %s85 = sadd.s32 %s84, 1
      %s86 = scalar_select %p83, %s84, %s85
      %p89 = pneg %p83
      %p90 = scmp.eq.s32.totalorder %s11, 1
      %p91 = por %p89, %p90
      %p92 = scmp.ne.s32.totalorder %s84, %s87
      %p93 = scmp.eq.s32.totalorder %s11, 0
      %p94 = por %p92, %p93
      %p95 = scmp.ne.s32.totalorder %s84, %s87
      %p96 = scmp.eq.s32.totalorder %s16, 1
      %p97 = por %p95, %p96
      %p98 = scmp.ne.s32.totalorder %s87, %s88
      %p99 = scmp.eq.s32.totalorder %s16, 0
      %p100 = por %p98, %p99
      %p101 = scmp.ne.s32.totalorder %s87, %s88
      %p102 = scmp.eq.s32.totalorder %s17, 1
      %p103 = por %p101, %p102
      %p105 = scmp.ne.s32.totalorder %s88, %s104
      %p106 = scmp.eq.s32.totalorder %s17, 0
      %p107 = por %p105, %p106
      %p108 = scmp.le.s32.totalorder 1, %s11
      %p109 = scmp.lt.s32.totalorder %s11, 3
      %p110 = pnand %p108, %p109
      %p111 = pneg %p110
      // Predicated region
      $region9: #{tpu_custom_call.1} parent=5 // pred_check
        _
      $region10: #{tpu_custom_call.1} parent=5 // pred_check_branch
        %113 = sbr.rel (%p110) target = $region12
      $region11: #{tpu_custom_call.1} parent=5 // pred_region
        %s114 = ssub.s32 %s11, 1
        // Predicated region
        $region13: #{tpu_custom_call.1} parent=11 // pred_check
          %p115 = pneg %p44
        $region14: #{tpu_custom_call.1} parent=11 // pred_check_branch
          %117 = sbr.rel (%p115) target = $region16
        $region15: #{tpu_custom_call.1} parent=11 // pred_region
          _
        $region16: #{tpu_custom_call.1} parent=11 // pred_fallthru
          _
      $region12: #{tpu_custom_call.1} parent=5 // pred_fallthru
        _
      %p118 = scmp.lt.s32.totalorder %s11, 2
      // Predicated region
      $region17: #{tpu_custom_call.1} parent=5 // pred_check
        %p119 = pneg %p118
      $region18: #{tpu_custom_call.1} parent=5 // pred_check_branch
        %121 = sbr.rel (%p119) target = $region20
      $region19: #{tpu_custom_call.1} parent=5 // pred_region
        // Predicated region
        $region21: #{tpu_custom_call.1} parent=19 // pred_check
          %p122 = pneg %p66
        $region22: #{tpu_custom_call.1} parent=19 // pred_check_branch
          %124 = sbr.rel (%p122) target = $region24
        $region23: #{tpu_custom_call.1} parent=19 // pred_region
          %p125 = scmp.lt.s32.totalorder %s18, 1
          %s126 = scalar_select %p125, %s18, 1
          %p127 = scmp.lt.s32.totalorder %s19, 0
          %s128 = scalar_select %p127, %s19, 0
          %s129 = smul.addr %s126, 2
          %s130 = sadd.s32 %s128, %s129
          %s131 = smul.addr %s130, 8
          %s132 = scalar_lea.vmem %s1, %s131
        $region24: #{tpu_custom_call.1} parent=19 // pred_fallthru
          _
      $region20: #{tpu_custom_call.1} parent=5 // pred_fallthru
        _
      %p133 = scmp.le.s32.totalorder 1, %s11
      %p134 = scmp.lt.s32.totalorder %s11, 3
      %p135 = pnand %p133, %p134
      %p136 = pneg %p135
      // Predicated region
      $region25: #{tpu_custom_call.1} parent=5 // pred_check
        _
      $region26: #{tpu_custom_call.1} parent=5 // pred_check_branch
        %138 = sbr.rel (%p135) target = $region28
      $region27: #{tpu_custom_call.1} parent=5 // pred_region
        %s139 = ssub.s32 %s11, 1
        %p140 = pneg %p44
        %p141 = pneg %p41
        %p142 = scmp.lt.s32.totalorder %s20, 1
        %s143 = scalar_select %p142, %s20, 1
        %p144 = scmp.lt.s32.totalorder %s21, 0
        %s145 = scalar_select %p144, %s21, 0
        %s146 = smul.addr %s143, 2
        %s147 = sadd.s32 %s145, %s146
        %s148 = smul.addr %s147, 8
        %s149 = scalar_lea.vmem %s1, %s148
        %p150 = pneg %p72
        %p151 = pneg %p69
        %p152 = pneg %p100
        %p153 = pneg %p97
        %s154 = sand.u32 %s87, 1
        %s155 = scalar_lea.sflag [#allocation3], %s154
        %s156 = sand.u32 %s87, 1
        %s157 = smul.addr %s156, 32
        %s158 = scalar_lea.vmem [#allocation2], %s157
        %p159 = scmp.lt.s32.totalorder %s20, 1
        %s160 = scalar_select %p159, %s20, 1
        %p161 = scmp.lt.s32.totalorder %s21, 0
        %s162 = scalar_select %p161, %s21, 0
        %s163 = smul.addr %s160, 2
        %s164 = sadd.s32 %s162, %s163
        %s165 = smul.addr %s164, 8
        %s166 = scalar_lea.vmem %s1, %s165
        %v167 = vld [vmem:[%s0] sm:$0xff]
        %v168 = vld [vmem:[%s0 + $0x8] sm:$0xff]
        %v169 = vld [vmem:[%s0 + $0x10] sm:$0xff]
        %v170 = vld [vmem:[%s0 + $0x18] sm:$0xff]
        %v171 = vld [vmem:[%s166] sm:$0xff]
        %v172 = vld [vmem:[%s166 + $0x8] sm:$0xff]
        %vm173 = vcmask 130048
        %v175 = vsel %vm173, %v167, 0
        %v178 = vsel %vm173, %v168, 0
        %v181 = vsel %vm173, %v169, 0
        %v184 = vsel %vm173, %v170, 0
        %186 = vmatpush.msra.mxu0 0.0
        %187 = vmatpush.msra.mxu0 0.0
        %188 = vmatpush.msra.mxu0 0.0
        %189 = vmatpush.msra.mxu0 0.0
        %190 = vmatpush.msra.mxu0 0.0
        %191 = vmatpush.msra.mxu0 0.0
        %192 = vmatpush.msra.mxu0 0.0
        %193 = vmatpush.msra.mxu0 0.0
        %194 = vmatpush.msra.mxu0 0.0
        %195 = vmatpush.msra.mxu0 0.0
        %196 = vmatpush.msra.mxu0 0.0
        %197 = vmatpush.msra.mxu0 0.0
        %198 = vmatpush.msra.mxu0 0.0
        %199 = vmatpush.msra.mxu0 0.0
        %200 = vmatpush.msra.mxu0 %v172
        %201 = vmatpush.msra.mxu0 %v171
        %202 = vmatmul.f32.gmra.mxu0 %v175
        %v203 = vpop.f32.mrf.mxu0
        %v204 = vadd.f32 0.0, %v203
        %205 = vmatmul.f32.gmra.mxu0 %v178
        %v206 = vpop.f32.mrf.mxu0
        %v207 = vadd.f32 0.0, %v206
        %208 = vmatmul.f32.gmra.mxu0 %v181
        %v209 = vpop.f32.mrf.mxu0
        %v210 = vadd.f32 0.0, %v209
        %211 = vmatmul.f32.gmra.mxu0 %v184
        %v212 = vpop.f32.mrf.mxu0
        %v213 = vadd.f32 0.0, %v212
        %214 = vdwg.mxu0
        %215 = vst [vmem:[%s158] sm:$0xff] %v204
        %216 = vst [vmem:[%s158 + $0x8] sm:$0xff] %v207
        %217 = vst [vmem:[%s158 + $0x10] sm:$0xff] %v210
        %218 = vst [vmem:[%s158 + $0x18] sm:$0xff] %v213
        %s219 = sand.u32 %s87, 1
        %s220 = scalar_lea.sflag [#allocation3], %s219
        %s221 = sand.u32 %s87, 1
        %s222 = smul.addr %s221, 32
        %s223 = scalar_lea.vmem [#allocation2], %s222
        // Predicated region
        $region29: #{tpu_custom_call.1} parent=27 // pred_check
          %p224 = pneg %p97
        $region30: #{tpu_custom_call.1} parent=27 // pred_check_branch
          %226 = sbr.rel (%p224) target = $region32
        $region31: #{tpu_custom_call.1} parent=27 // pred_region
          %228 = vsyncadd %s220, 0
          %s229 = smul.addr %s20, 4
          %s230 = sadd.s32 %s21, %s229
          %s231 = smul.addr %s230, 8
          %s232 = scalar_lea.hbm %s2, %s231
          %s233 = sshll.u32 %s223, 4
          %s234 = int_to_ptr.vmem [resolvable:$true] %s233
          %s235 = sshll.u32 %s232, 4
          %s236 = int_to_ptr.hbm [resolvable:$true] %s235
          %241 = dma.vmem_to_hbm [thread:$0]  %s234, 512, %s236, %s220, 128, 128, 8
        $region32: #{tpu_custom_call.1} parent=27 // pred_fallthru
          _
      $region28: #{tpu_custom_call.1} parent=5 // pred_fallthru
        _
      %p242 = scmp.le.s32.totalorder 2, %s11
      // Predicated region
      $region33: #{tpu_custom_call.1} parent=5 // pred_check
        %p243 = pneg %p242
      $region34: #{tpu_custom_call.1} parent=5 // pred_check_branch
        %245 = sbr.rel (%p243) target = $region36
      $region35: #{tpu_custom_call.1} parent=5 // pred_region
        %s246 = ssub.s32 %s11, 2
        // Predicated region
        $region37: #{tpu_custom_call.1} parent=35 // pred_check
          %p247 = pneg %p103
        $region38: #{tpu_custom_call.1} parent=35 // pred_check_branch
          %249 = sbr.rel (%p247) target = $region40
        $region39: #{tpu_custom_call.1} parent=35 // pred_region
          %s250 = sand.u32 %s88, 1
          %s251 = scalar_lea.sflag [#allocation3], %s250
          %s252 = sand.u32 %s88, 1
          %s253 = smul.addr %s252, 32
          %s254 = scalar_lea.vmem [#allocation2], %s253
          %256 = dma.done %s251, 512
        $region40: #{tpu_custom_call.1} parent=35 // pred_fallthru
          _
      $region36: #{tpu_custom_call.1} parent=5 // pred_fallthru
        _
    $region6: #{tpu_custom_call.1} parent=1 // loop_footer
      %s15 = sadd.s32 1, %s11
    $region7: #{tpu_custom_call.1} parent=1 // loop_footer_branch
      %10 = sbr.rel target = $region3
    $region8: #{tpu_custom_call.1} parent=1 // loop_exit
      _
    %257 = vsyncpa [#allocation3], 1
    %s258 = scalar_lea.sflag [#allocation3], 1
    %259 = vsyncpa %s258, 1

</llo_original>
